<compile_context>
chip_gen: v6e
topology: v6e:2x2x1
jax: 0.10.0
libtpu: 0.0.40
codegen_flags: <defaults>
</compile_context>

<pallas_src>
import jax
import jax.numpy as jnp
from jax.experimental import pallas as pl
from jax.experimental.pallas import tpu as pltpu


def _round_up(x, m):
    return ((x + m - 1) // m) * m


def _conv_stats_kernel(x_ref, w_ref, y_ref, sum_ref, sq_ref):
    """Conv tile (MXU) + per-channel partial BN statistics.

    x_ref:   (K, TM)  bf16  im2col patch tile, lane dim = M (lane dense)
    w_ref:   (C, K)   bf16  conv weight as (Cout, KH*KW*Cin)
    y_ref:   (C, TM)  bf16  pre-BN conv output tile (bf16 to halve HBM traffic)
    sum_ref: (C, 1)   f32   per-channel partial sum for this tile
    sq_ref:  (C, 1)   f32   per-channel partial sum of squares for this tile
    """
    y = jnp.dot(w_ref[...], x_ref[...], preferred_element_type=jnp.float32)
    y_ref[...] = y.astype(y_ref.dtype)
    # Single-pass stats in f32 (exact, independent of bf16 storage of y);
    # cross-lane reductions go to the XLU (free while mem-bound).
    sum_ref[...] = jnp.sum(y, axis=1, keepdims=True)
    sq_ref[...] = jnp.sum(y * y, axis=1, keepdims=True)


def _bn_lrelu_kernel(y_ref, scale_ref, shift_ref, o_ref):
    """Folded BatchNorm (y*scale + shift) + LeakyReLU(0.2), f32 VPU work."""
    z = y_ref[...].astype(jnp.float32) * scale_ref[...] + shift_ref[...]
    o_ref[...] = jnp.maximum(z, 0.2 * z)


def convolution_block(x_nchw, weight, gamma, beta, *, stride, tile_m=1024):
    """x_nchw: (N, Cin, H, W); weight: (Cout, Cin, 4, 4) (PyTorch layout)."""
    N, Cin, H, W = x_nchw.shape
    Cout, Cin_w, KH, KW = weight.shape
    assert Cin_w == Cin
    pad = 1
    OH = (H + 2 * pad - KH) // stride + 1
    OW = (W + 2 * pad - KW) // stride + 1
    M = N * OH * OW
    K = KH * KW * Cin

    # ---- glue: NCHW -> NHWC, pad, im2col in (K, M) orientation (lane dim = M).
    x = jnp.transpose(x_nchw, (0, 2, 3, 1))
    xp = jnp.pad(x, ((0, 0), (pad, pad), (pad, pad), (0, 0)))
    taps = []
    for kh in range(KH):
        for kw in range(KW):
            taps.append(
                xp[:, kh:kh + stride * OH:stride, kw:kw + stride * OW:stride, :]
            )
    patches = jnp.stack(taps, axis=0)                      # (KH*KW, N, OH, OW, Cin)
    patches = jnp.transpose(patches, (0, 4, 1, 2, 3))      # (KH*KW, Cin, N, OH, OW)
    patches = patches.reshape(K, M).astype(jnp.bfloat16)   # bf16 feed to the MXU

    # (Cout, Cin, KH, KW) -> (Cout, KH, KW, Cin) -> (Cout, K); matches patch k-order.
    w_ck = jnp.transpose(weight, (0, 2, 3, 1)).reshape(Cout, K).astype(jnp.bfloat16)

    # ---- tiling over M (tiny per-tile VMEM, double buffered by BlockSpec).
    tm = _round_up(max(128, min(tile_m, M)), 128)
    m_pad = _round_up(M, tm)
    nt = m_pad // tm
    if m_pad != M:
        # Zero-padded columns contribute 0 to both sum and sum-of-squares, and the
        # mean/var below divide by the real M, so stats stay exact.
        patches = jnp.pad(patches, ((0, 0), (0, m_pad - M)))

    cparams = pltpu.CompilerParams(
        dimension_semantics=("parallel",),          # v7x: shard M tiles across 2 TCs
        vmem_limit_bytes=32 * 1024 * 1024,
    )

    # ---- pass 1: conv tiles + per-tile partial BN sums.
    cost1 = pl.CostEstimate(
        flops=2 * m_pad * K * Cout,
        transcendentals=0,
        bytes_accessed=(K * m_pad * 2 + Cout * K * 2
                        + Cout * m_pad * 2 + 2 * nt * Cout * 4),
    )
    y, psum, psq = pl.pallas_call(
        _conv_stats_kernel,
        out_shape=(
            jax.ShapeDtypeStruct((Cout, m_pad), jnp.bfloat16),
            jax.ShapeDtypeStruct((nt, Cout, 1), jnp.float32),
            jax.ShapeDtypeStruct((nt, Cout, 1), jnp.float32),
        ),
        grid=(nt,),
        in_specs=[
            pl.BlockSpec((K, tm), lambda i: (0, i)),
            pl.BlockSpec((Cout, K), lambda i: (0, 0)),
        ],
        out_specs=(
            pl.BlockSpec((Cout, tm), lambda i: (0, i)),
            pl.BlockSpec((None, Cout, 1), lambda i: (i, 0, 0)),
            pl.BlockSpec((None, Cout, 1), lambda i: (i, 0, 0)),
        ),
        compiler_params=cparams,
        cost_estimate=cost1,
    )(patches, w_ck)

    # ---- fold global BatchNorm2d (training-mode) stats into scale/shift (tiny glue).
    total_sum = jnp.sum(psum, axis=0)[:, 0]                 # (Cout,)
    total_sq = jnp.sum(psq, axis=0)[:, 0]                   # (Cout,)
    mean = total_sum / M
    var = jnp.maximum(total_sq / M - mean * mean, 0.0)      # biased variance
    inv_std = jax.lax.rsqrt(var + 1e-5)                     # eps = 1e-5 (PyTorch default)
    g = gamma.astype(jnp.float32)
    b = beta.astype(jnp.float32)
    scale = (g * inv_std).reshape(Cout, 1)
    shift = (b - mean * g * inv_std).reshape(Cout, 1)

    # ---- pass 2: normalize + LeakyReLU on lane-dense (Cout, M) tiles.
    cost2 = pl.CostEstimate(
        flops=4 * m_pad * Cout,
        transcendentals=0,
        bytes_accessed=Cout * m_pad * 2 + Cout * m_pad * 4 + 2 * Cout * 4,
    )
    out = pl.pallas_call(
        _bn_lrelu_kernel,
        out_shape=jax.ShapeDtypeStruct((Cout, m_pad), jnp.float32),
        grid=(nt,),
        in_specs=[
            pl.BlockSpec((Cout, tm), lambda i: (0, i)),
            pl.BlockSpec((Cout, 1), lambda i: (0, 0)),
            pl.BlockSpec((Cout, 1), lambda i: (0, 0)),
        ],
        out_specs=pl.BlockSpec((Cout, tm), lambda i: (0, i)),
        compiler_params=cparams,
        cost_estimate=cost2,
    )(y, scale, shift)

    # (Cout, M) -> (Cout, N, OH, OW) -> NCHW
    out = out[:, :M].reshape(Cout, N, OH, OW)
    return jnp.transpose(out, (1, 0, 2, 3))


def _reference(x, weight, gamma, beta, stride):
    """Plain-JAX f32 reference of the PyTorch module's forward pass."""
    y = jax.lax.conv_general_dilated(
        x, weight, window_strides=(stride, stride), padding=((1, 1), (1, 1)),
        dimension_numbers=("NCHW", "OIHW", "NCHW"))
    mean = jnp.mean(y, axis=(0, 2, 3), keepdims=True)
    var = jnp.mean(jnp.square(y - mean), axis=(0, 2, 3), keepdims=True)
    z = (y - mean) * jax.lax.rsqrt(var + 1e-5)
    z = z * gamma.reshape(1, -1, 1, 1) + beta.reshape(1, -1, 1, 1)
    return jnp.where(z >= 0, z, 0.2 * z)


if __name__ == "__main__":
    key = jax.random.PRNGKey(0)
    k_x, k_w, k_g, k_b = jax.random.split(key, 4)

    N, Cin, H, W = 2, 4, 16, 16
    Cout, stride = 8, 2

    x = jax.random.normal(k_x, (N, Cin, H, W), dtype=jnp.float32)
    weight = 0.05 * jax.random.normal(k_w, (Cout, Cin, 4, 4), dtype=jnp.float32)
    gamma = 1.0 + 0.1 * jax.random.normal(k_g, (Cout,), dtype=jnp.float32)
    beta = 0.1 * jax.random.normal(k_b, (Cout,), dtype=jnp.float32)

    y = convolution_block(x, weight, gamma, beta, stride=stride)
    jax.block_until_ready(y)

    assert y.shape == (N, Cout, 8, 8), y.shape

    y_ref = _reference(x, weight, gamma, beta, stride)
    max_err = float(jnp.max(jnp.abs(y - y_ref)))
    assert max_err < 5e-2, f"max abs err vs reference: {max_err}"

    print("KERNEL_OK")
</pallas_src>

<mosaic_0001>
module attributes {stable_mosaic.version = 11 : i64} {
  func.func @_conv_stats_kernel(%arg0: i32, %arg1: memref<64x128xbf16, #tpu.memory_space<vmem>>, %arg2: memref<8x64xbf16, #tpu.memory_space<vmem>>, %arg3: memref<8x128xbf16, #tpu.memory_space<vmem>>, %arg4: memref<1x8x1xf32, #tpu.memory_space<vmem>>, %arg5: memref<1x8x1xf32, #tpu.memory_space<vmem>>) attributes {dimension_semantics = [#tpu.dimension_semantics<parallel>], iteration_bounds = array<i64: 1>, scalar_prefetch = 0 : i64, scratch_operands = 0 : i64, tpu.core_type = #tpu.core_type<tc>, window_params = [{transform_indices = @transform_0, window_bounds = array<i64: 64, 128>}, {pipeline_mode = #tpu.pipeline_mode<synchronous>, transform_indices = @transform_1, window_bounds = array<i64: 8, 64>}, {transform_indices = @transform_2, window_bounds = array<i64: 8, 128>}, {transform_indices = @transform_3, window_bounds = array<i64: 1, 8, 1>}, {transform_indices = @transform_4, window_bounds = array<i64: 1, 8, 1>}]} {
    %c0 = arith.constant 0 : index
    %c0_0 = arith.constant 0 : index
    %0 = vector.load %arg2[%c0, %c0_0] : memref<8x64xbf16, #tpu.memory_space<vmem>>, vector<8x64xbf16>
    %c0_1 = arith.constant 0 : index
    %c0_2 = arith.constant 0 : index
    %1 = vector.load %arg1[%c0_1, %c0_2] : memref<64x128xbf16, #tpu.memory_space<vmem>>, vector<64x128xbf16>
    %cst = arith.constant dense<0.000000e+00> : vector<8x128xf32>
    %2 = tpu.matmul %0, %1, %cst {dimension_numbers = #tpu.dot_dimension_numbers<[1], [0], [0], [1], [0, 0, 1, 1], [], []>} : vector<8x64xbf16>, vector<64x128xbf16>, vector<8x128xf32> -> vector<8x128xf32>
    %3 = arith.truncf %2 : vector<8x128xf32> to vector<8x128xbf16>
    %c0_3 = arith.constant 0 : index
    %c0_4 = arith.constant 0 : index
    %4 = vector.load %arg3[%c0_3, %c0_4] : memref<8x128xbf16, #tpu.memory_space<vmem>>, vector<8x128xbf16>
    tpu.vector_store %arg3[%c0_3, %c0_4], %3 {strides = array<i32>} : memref<8x128xbf16, #tpu.memory_space<vmem>>, vector<8x128xbf16>,
    %cst_5 = arith.constant dense<0.000000e+00> : vector<8xf32>
    %5 = vector.multi_reduction <add>, %2, %cst_5 [1] : vector<8x128xf32> to vector<8xf32>
    %6 = vector.shape_cast %5 : vector<8xf32> to vector<8x1xf32>
    %c0_6 = arith.constant 0 : index
    %c0_7 = arith.constant 0 : index
    %c0_8 = arith.constant 0 : index
    %7 = vector.load %arg4[%c0_6, %c0_7, %c0_8] : memref<1x8x1xf32, #tpu.memory_space<vmem>>, vector<1x8x1xf32>
    %8 = vector.shape_cast %7 : vector<1x8x1xf32> to vector<8x1xf32>
    %9 = vector.shape_cast %6 : vector<8x1xf32> to vector<1x8x1xf32>
    tpu.vector_store %arg4[%c0_6, %c0_7, %c0_8], %9 {strides = array<i32>} : memref<1x8x1xf32, #tpu.memory_space<vmem>>, vector<1x8x1xf32>,
    %10 = arith.mulf %2, %2 : vector<8x128xf32>
    %cst_9 = arith.constant dense<0.000000e+00> : vector<8xf32>
    %11 = vector.multi_reduction <add>, %10, %cst_9 [1] : vector<8x128xf32> to vector<8xf32>
    %12 = vector.shape_cast %11 : vector<8xf32> to vector<8x1xf32>
    %c0_10 = arith.constant 0 : index
    %c0_11 = arith.constant 0 : index
    %c0_12 = arith.constant 0 : index
    %13 = vector.load %arg5[%c0_10, %c0_11, %c0_12] : memref<1x8x1xf32, #tpu.memory_space<vmem>>, vector<1x8x1xf32>
    %14 = vector.shape_cast %13 : vector<1x8x1xf32> to vector<8x1xf32>
    %15 = vector.shape_cast %12 : vector<8x1xf32> to vector<1x8x1xf32>
    tpu.vector_store %arg5[%c0_10, %c0_11, %c0_12], %15 {strides = array<i32>} : memref<1x8x1xf32, #tpu.memory_space<vmem>>, vector<1x8x1xf32>,
    return
  }
  func.func @transform_0(%arg0: i32) -> (i32, i32) {
    %c0_i32 = arith.constant 0 : i32
    %c0_i32_0 = arith.constant 0 : i32
    return %c0_i32, %arg0 : i32, i32
  }
  func.func @transform_1(%arg0: i32) -> (i32, i32) {
    %c0_i32 = arith.constant 0 : i32
    %c0_i32_0 = arith.constant 0 : i32
    %c0_i32_1 = arith.constant 0 : i32
    return %c0_i32, %c0_i32_0 : i32, i32
  }
  func.func @transform_2(%arg0: i32) -> (i32, i32) {
    %c0_i32 = arith.constant 0 : i32
    %c0_i32_0 = arith.constant 0 : i32
    return %c0_i32, %arg0 : i32, i32
  }
  func.func @transform_3(%arg0: i32) -> (i32, i32, i32) {
    %c0_i32 = arith.constant 0 : i32
    %c0_i32_0 = arith.constant 0 : i32
    %c0_i32_1 = arith.constant 0 : i32
    return %arg0, %c0_i32, %c0_i32_0 : i32, i32, i32
  }
  func.func @transform_4(%arg0: i32) -> (i32, i32, i32) {
    %c0_i32 = arith.constant 0 : i32
    %c0_i32_0 = arith.constant 0 : i32
    %c0_i32_1 = arith.constant 0 : i32
    return %arg0, %c0_i32, %c0_i32_0 : i32, i32, i32
  }
}

</mosaic_0001>

<llo_original>
// kernel: tpu_custom_call.1
$region0: #{tpu_custom_call.1}
  #allocation0 [shape = 'u32[]', space=smem, size = 0x4, offset = 0x4, fixed_abs, tag = 'smem constant byte address 0x4 - core index']
  #allocation1 [shape = 'u32[144,128]{1,0:T(1,128)}', space=vmem, size = 0x12000, scoped, tag = 'internal scratch']
  %s0 = inlined_call_operand.hbm [shape: bf16[64,128], index: 0, kind: input, shape index: {}]
  %s1 = inlined_call_operand.hbm [shape: bf16[8,64], index: 1, kind: input, shape index: {}]
  %s2 = inlined_call_operand.hbm [shape: bf16[8,128], index: 2, kind: output, shape index: {0}]
  %s3 = inlined_call_operand.vmem [shape: f32[1,8,1], index: 3, kind: output, shape index: {1}]
  %s4 = inlined_call_operand.vmem [shape: f32[1,8,1], index: 4, kind: output, shape index: {2}]
  %5 = xla_tuple %s2, %s3, %s4
  %s6 = sld [smem:[#allocation0]]
  $region42: #{tpu_custom_call.1} parent=0
    _
  %s8 = ssub.s32 1, %s6
  %s9 = scalar_select 0, %s8, %s6
  $region1: #{tpu_custom_call.1} parent=0
    #allocation2 [shape = 'u8[16384]{0}', space=vmem, size = 0x4000, scoped, tag = 'input window, operand 0, single buffered']
    #allocation3 [shape = 's32[1]{0}', space=sflag, size = 0x4, scoped, tag = 'scoped memory for tpu_custom_call.1']
    #allocation4 [shape = 's32[1]{0}', space=sflag, size = 0x4, scoped, tag = 'scoped memory for tpu_custom_call.1']
    #allocation5 [shape = 'u8[2048]{0}', space=vmem, size = 0x800, scoped, tag = 'input window, operand 1, single buffered']
    #allocation6 [shape = 's32[1]{0}', space=sflag, size = 0x4, scoped, tag = 'scoped memory for tpu_custom_call.1']
    #allocation7 [shape = 'u8[2048]{0}', space=vmem, size = 0x800, scoped, tag = 'output window, operand 0, single buffered']
    %10 = vsyncpa [#allocation3], 0
    %11 = vsyncpa [#allocation6], 0
    %12 = vsyncpa [#allocation4], 0
    // Predicated region
    $region2: #{tpu_custom_call.1} parent=1 // pred_check
      _
    $region3: #{tpu_custom_call.1} parent=1 // pred_check_branch
      %14 = sbr.rel (0) target = $region5
    $region4: #{tpu_custom_call.1} parent=1 // pred_region
      %s16 = ssub.s32 512, 512
      %17 = vsyncadd [#allocation3], %s16
      %s18 = sshll.u32 [#allocation2], 4
      %s19 = int_to_ptr.vmem [resolvable:$true] %s18
      %24 = dma.hbm_to_vmem [thread:$0]  %s0, 512, %s19, [#allocation3], 64, 64, 4
    $region5: #{tpu_custom_call.1} parent=1 // pred_fallthru
      _
    // Predicated region
    $region6: #{tpu_custom_call.1} parent=1 // pred_check
      _
    $region7: #{tpu_custom_call.1} parent=1 // pred_check_branch
      %26 = sbr.rel (0) target = $region9
    $region8: #{tpu_custom_call.1} parent=1 // pred_region
      %s28 = ssub.s32 64, 64
      %29 = vsyncadd [#allocation6], %s28
      %s31 = sshll.u32 [#allocation5], 4
      %s32 = int_to_ptr.vmem [resolvable:$true] %s31
      %34 = dma.hbm_to_vmem [thread:$0]  %s1, 64, %s32, [#allocation6]
    $region9: #{tpu_custom_call.1} parent=1 // pred_fallthru
      _
    // Predicated region
    $region10: #{tpu_custom_call.1} parent=1 // pred_check
      _
    $region11: #{tpu_custom_call.1} parent=1 // pred_check_branch
      %36 = sbr.rel (0) target = $region13
    $region12: #{tpu_custom_call.1} parent=1 // pred_region
      %37 = dma.done [#allocation3], 512
    $region13: #{tpu_custom_call.1} parent=1 // pred_fallthru
      _
    // Predicated region
    $region14: #{tpu_custom_call.1} parent=1 // pred_check
      _
    $region15: #{tpu_custom_call.1} parent=1 // pred_check_branch
      %39 = sbr.rel (0) target = $region17
    $region16: #{tpu_custom_call.1} parent=1 // pred_region
      %40 = dma.done [#allocation6], 64
    $region17: #{tpu_custom_call.1} parent=1 // pred_fallthru
      _
    %v42 = vld [vmem:[#allocation5] sm:$0xf]
    %v43 = vld [vmem:[#allocation2] sm:$0xf]
    %v44 = vld [vmem:[#allocation2 + $0x4] sm:$0xf]
    %v45 = vld [vmem:[#allocation2 + $0x8] sm:$0xf]
    %v46 = vld [vmem:[#allocation2 + $0xc] sm:$0xf]
    %v47 = vld [vmem:[#allocation2 + $0x10] sm:$0xf]
    %v48 = vld [vmem:[#allocation2 + $0x14] sm:$0xf]
    %v49 = vld [vmem:[#allocation2 + $0x18] sm:$0xf]
    %v50 = vld [vmem:[#allocation2 + $0x1c] sm:$0xf]
    %v59 = vunpack.c.l.b16 %v43
    %v60 = vunpack.c.l.b16 %v44
    %v61 = vunpack.c.l.b16 %v45
    %v62 = vunpack.c.l.b16 %v46
    %v63 = vunpack.c.l.b16 %v47
    %v64 = vunpack.c.l.b16 %v48
    %v65 = vunpack.c.l.b16 %v49
    %v66 = vunpack.c.l.b16 %v50
    %v67 = vpack.c.b16 %v60, %v59
    %v68 = vpack.c.b16 %v62, %v61
    %v69 = vpack.c.b16 %v64, %v63
    %v70 = vpack.c.b16 %v66, %v65
    %vm75 = vcmask 523264
    %v77 = vsel %vm75, %v42, 0
    %79 = vmatprep.subr.bf16.mxu0 0
    %80 = vmatpush1.bf16.msra.mxu0 0
    %81 = vmatprep.subr.bf16.mxu0 0
    %82 = vmatpush1.bf16.msra.mxu0 0
    %83 = vmatprep.subr.bf16.mxu0 0
    %84 = vmatpush1.bf16.msra.mxu0 0
    %85 = vmatprep.subr.bf16.mxu0 0
    %86 = vmatpush1.bf16.msra.mxu0 0
    %87 = vmatprep.subr.bf16.mxu0 0
    %88 = vmatpush1.bf16.msra.mxu0 %v70
    %89 = vmatprep.subr.bf16.mxu0 0
    %90 = vmatpush1.bf16.msra.mxu0 %v69
    %91 = vmatprep.subr.bf16.mxu0 0
    %92 = vmatpush1.bf16.msra.mxu0 %v68
    %93 = vmatprep.subr.bf16.mxu0 0
    %94 = vmatpush1.bf16.msra.mxu0 %v67
    %95 = vmatprep.subr.bf16.mxu0 0
    %96 = vmatpush2.bf16.msra.mxu0 0
    %97 = vmatprep.subr.bf16.mxu0 0
    %98 = vmatpush2.bf16.msra.mxu0 0
    %99 = vmatprep.subr.bf16.mxu0 0
    %100 = vmatpush2.bf16.msra.mxu0 0
    %101 = vmatprep.subr.bf16.mxu0 0
    %102 = vmatpush2.bf16.msra.mxu0 0
    %103 = vmatprep.subr.bf16.mxu0 0
    %104 = vmatpush2.bf16.msra.mxu0 0
    %105 = vmatprep.subr.bf16.mxu0 0
    %106 = vmatpush2.bf16.msra.mxu0 0
    %107 = vmatprep.subr.bf16.mxu0 0
    %108 = vmatpush2.bf16.msra.mxu0 0
    %109 = vmatprep.subr.bf16.mxu0 0
    %110 = vmatpush2.bf16.msra.mxu0 0
    %111 = vmatprep.mubr.bf16.mxu0 0
    %112 = vmatmul.mubr.bf16.gmra.mxu0 %v77
    %v113 = vpop.f32.mrf.mxu0
    %v114 = vadd.f32 0.0, %v113
    %v115 = vpop.f32.mrf.mxu0
    %v116 = vpop.f32.mrf.mxu0
    %v117 = vpop.f32.mrf.mxu0
    %118 = vdwg.mxu0
    %v119 = vpack.c.bf16 %v114, %v114
    %120 = vst [vmem:[#allocation7] sm:$0xf] %v119
    %121 = vadd.xlane.f32.xlu0 %v114
    %v122 = vpop.xlane.xlu0 %121
    %vm123 = vcmask 7168
    %124 = vst.msk [vmem:[%s3] sm:$0xff] %vm123, %v122
    %v125 = vmul.f32 %v114, %v114
    %126 = vadd.xlane.f32.xlu0 %v125
    %v127 = vpop.xlane.xlu0 %126
    %128 = vst.msk [vmem:[%s4] sm:$0xff] %vm123, %v127
    // Predicated region
    $region18: #{tpu_custom_call.1} parent=1 // pred_check
      _
    $region19: #{tpu_custom_call.1} parent=1 // pred_check_branch
      %130 = sbr.rel (0) target = $region21
    $region20: #{tpu_custom_call.1} parent=1 // pred_region
      %s132 = ssub.s32 64, 64
      %133 = vsyncadd [#allocation4], %s132
      %s135 = sshll.u32 [#allocation7], 4
      %s136 = int_to_ptr.vmem [resolvable:$true] %s135
      %138 = dma.vmem_to_hbm [thread:$0]  %s136, 64, %s2, [#allocation4]
    $region21: #{tpu_custom_call.1} parent=1 // pred_fallthru
      _
    // Predicated region
    $region22: #{tpu_custom_call.1} parent=1 // pred_check
      _
    $region23: #{tpu_custom_call.1} parent=1 // pred_check_branch
      %140 = sbr.rel (0) target = $region25
    $region24: #{tpu_custom_call.1} parent=1 // pred_region
      _
    $region25: #{tpu_custom_call.1} parent=1 // pred_fallthru
      _
    // Predicated region
    $region26: #{tpu_custom_call.1} parent=1 // pred_check
      _
    $region27: #{tpu_custom_call.1} parent=1 // pred_check_branch
      %142 = sbr.rel (0) target = $region29
    $region28: #{tpu_custom_call.1} parent=1 // pred_region
      _
    $region29: #{tpu_custom_call.1} parent=1 // pred_fallthru
      _
    // Predicated region
    $region30: #{tpu_custom_call.1} parent=1 // pred_check
      _
    $region31: #{tpu_custom_call.1} parent=1 // pred_check_branch
      %144 = sbr.rel (0) target = $region33
    $region32: #{tpu_custom_call.1} parent=1 // pred_region
      %145 = dma.done [#allocation4], 64
    $region33: #{tpu_custom_call.1} parent=1 // pred_fallthru
      _
    // Predicated region
    $region34: #{tpu_custom_call.1} parent=1 // pred_check
      _
    $region35: #{tpu_custom_call.1} parent=1 // pred_check_branch
      %147 = sbr.rel (0) target = $region37
    $region36: #{tpu_custom_call.1} parent=1 // pred_region
      _
    $region37: #{tpu_custom_call.1} parent=1 // pred_fallthru
      _
    // Predicated region
    $region38: #{tpu_custom_call.1} parent=1 // pred_check
      _
    $region39: #{tpu_custom_call.1} parent=1 // pred_check_branch
      %149 = sbr.rel (0) target = $region41
    $region40: #{tpu_custom_call.1} parent=1 // pred_region
      _
    $region41: #{tpu_custom_call.1} parent=1 // pred_fallthru
      _
    %150 = vsyncpa [#allocation3], 1
    %151 = vsyncpa [#allocation6], 1
    %152 = vsyncpa [#allocation4], 1

</llo_original>
